<compile_context>
chip_gen: v7x
topology: tpu7x:2x2x1
jax: 0.10.0
libtpu: 0.0.40
codegen_flags: <defaults>
</compile_context>

<pallas_src>
import functools

import jax
import jax.numpy as jnp
from jax.experimental import pallas as pl
from jax.experimental.pallas import tpu as pltpu

_NUM_HEADS = 5                    # numerical heads, 3 classes each
_ROWS = 3 * _NUM_HEADS + 2        # 17 logit rows (15 numerical + 2 mode)
_TGT_ROWS = _NUM_HEADS + 1        # 6 target rows


# ---------------------------------------------------------------------------
# Shared per-example CE helpers (pure elementwise VPU/EUP work, no XLU).
# All arguments share one batch-dense shape ((1, B) rows or (8, 128) tiles).
# ---------------------------------------------------------------------------
def _ce3(r0, r1, r2, t):
    """3-class CE: logsumexp(r) - r[target], target selected by unrolled where."""
    m = jnp.maximum(jnp.maximum(r0, r1), r2)
    se = jnp.exp(r0 - m) + jnp.exp(r1 - m) + jnp.exp(r2 - m)
    lse = m + jnp.log(se)
    picked = jnp.where(t == 0, r0, jnp.where(t == 1, r1, r2))
    return lse - picked


def _ce2(r0, r1, t):
    """2-class CE via stable softplus(l_other - l_target): 1 exp + 1 log."""
    d = jnp.where(t == 0, r1 - r0, r0 - r1)
    return jnp.maximum(d, 0.0) + jnp.log(1.0 + jnp.exp(-jnp.abs(d)))


# ---------------------------------------------------------------------------
# Small-batch kernel: whole problem in one shot, batch on the lane axis.
# ---------------------------------------------------------------------------
def _flat_kernel(logits_ref, tgt_ref, out_ref, *, inv_b):
    # logits_ref: (17, B) storage-dtype; tgt_ref: (6, B) int32; out_ref: (1, 1) f32
    lv = logits_ref[...].astype(jnp.float32)
    tv = tgt_ref[...]

    per_ex = None                                    # (1, B) running CE sum over heads
    for h in range(_NUM_HEADS):
        r0 = lv[3 * h + 0:3 * h + 1, :]
        r1 = lv[3 * h + 1:3 * h + 2, :]
        r2 = lv[3 * h + 2:3 * h + 3, :]
        ce = _ce3(r0, r1, r2, tv[h:h + 1, :])
        per_ex = ce if per_ex is None else per_ex + ce
    per_ex = per_ex + _ce2(lv[_ROWS - 2:_ROWS - 1, :],
                           lv[_ROWS - 1:_ROWS, :],
                           tv[_TGT_ROWS - 1:_TGT_ROWS, :])

    # single cross-lane reduce, then scale by 1/B (true batch, baked in).
    out_ref[...] = jnp.sum(per_ex, axis=1, keepdims=True) * jnp.float32(inv_b)


# ---------------------------------------------------------------------------
# Large-batch kernel: batch packed as (rows, B/128, 128), gridded over batch,
# (8, 128) VMEM accumulator, single reduce + scale at the last step.
# ---------------------------------------------------------------------------
def _packed_kernel(logits_ref, tgt_ref, out_ref, acc_ref, *, inv_b):
    # logits_ref: (17, tb, 128); tgt_ref: (6, tb, 128) int32;
    # out_ref: (1, 1) f32; acc_ref: (tb, 128) f32 VMEM scratch.
    step = pl.program_id(0)

    @pl.when(step == 0)
    def _init():
        acc_ref[...] = jnp.zeros_like(acc_ref)

    per_ex = None                                    # (tb, 128), full vreg occupancy
    for h in range(_NUM_HEADS):
        r0 = logits_ref[3 * h + 0].astype(jnp.float32)
        r1 = logits_ref[3 * h + 1].astype(jnp.float32)
        r2 = logits_ref[3 * h + 2].astype(jnp.float32)
        ce = _ce3(r0, r1, r2, tgt_ref[h])
        per_ex = ce if per_ex is None else per_ex + ce
    per_ex = per_ex + _ce2(logits_ref[_ROWS - 2].astype(jnp.float32),
                           logits_ref[_ROWS - 1].astype(jnp.float32),
                           tgt_ref[_TGT_ROWS - 1])

    # padded examples carry target == -1 -> zero their contribution.
    per_ex = jnp.where(tgt_ref[0] >= 0, per_ex, 0.0)
    acc_ref[...] += per_ex

    @pl.when(step == pl.num_programs(0) - 1)
    def _finalize():
        tot = jnp.sum(acc_ref[...], axis=1, keepdims=True)        # (tb, 1)
        out_ref[...] = jnp.sum(tot, axis=0, keepdims=True) * jnp.float32(inv_b)


# ---------------------------------------------------------------------------
# Wrappers
# ---------------------------------------------------------------------------
_VMEM = pl.BlockSpec(memory_space=pltpu.MemorySpace.VMEM)


def _pack_inputs(numerical_outputs, mode_output, targets):
    """One (17, B) logits slab (storage dtype preserved) + one (6, B) int32 target slab."""
    dt = jnp.result_type(*(o.dtype for o in numerical_outputs), mode_output.dtype)
    parts = [jnp.transpose(o.astype(dt)) for o in numerical_outputs]   # 5 x (3, B)
    parts.append(jnp.transpose(mode_output.astype(dt)))                # (2, B)
    logits_t = jnp.concatenate(parts, axis=0)                          # (17, B)
    tgt_t = jnp.transpose(targets.astype(jnp.int32))                   # (6, B)
    return logits_t, tgt_t


def _loss_small(logits_t, tgt_t, batch):
    kernel = functools.partial(_flat_kernel, inv_b=1.0 / batch)
    out = pl.pallas_call(
        kernel,
        out_shape=jax.ShapeDtypeStruct((1, 1), jnp.float32),
        in_specs=[_VMEM, _VMEM],
        out_specs=_VMEM,
    )(logits_t, tgt_t)
    return out[0, 0]


def _loss_packed(logits_t, tgt_t, batch, *, tb=8, lanes=128):
    chunk = tb * lanes
    padded = ((batch + chunk - 1) // chunk) * chunk
    if padded != batch:
        logits_t = jnp.pad(logits_t, ((0, 0), (0, padded - batch)))
        tgt_t = jnp.pad(tgt_t, ((0, 0), (0, padded - batch)), constant_values=-1)
    logits3 = logits_t.reshape(_ROWS, padded // lanes, lanes)
    tgt3 = tgt_t.reshape(_TGT_ROWS, padded // lanes, lanes)
    steps = padded // chunk

    kernel = functools.partial(_packed_kernel, inv_b=1.0 / batch)
    out = pl.pallas_call(
        kernel,
        out_shape=jax.ShapeDtypeStruct((1, 1), jnp.float32),
        grid_spec=pltpu.PrefetchScalarGridSpec(
            num_scalar_prefetch=0,
            grid=(steps,),
            in_specs=[pl.BlockSpec((_ROWS, tb, lanes), lambda i: (0, i, 0)),
                      pl.BlockSpec((_TGT_ROWS, tb, lanes), lambda i: (0, i, 0))],
            out_specs=pl.BlockSpec((1, 1), lambda i: (0, 0)),
            scratch_shapes=[pltpu.VMEM((tb, lanes), jnp.float32)]),
        compiler_params=pltpu.CompilerParams(
            dimension_semantics=("arbitrary",)),
    )(logits3, tgt3)
    return out[0, 0]


def multitask_loss(numerical_outputs, mode_output, targets):
    """numerical_outputs: list of 5 arrays (B, 3); mode_output: (B, 2); targets: (B, 6) int."""
    batch = mode_output.shape[0]
    logits_t, tgt_t = _pack_inputs(numerical_outputs, mode_output, targets)
    if batch >= 1024:
        return _loss_packed(logits_t, tgt_t, batch)
    return _loss_small(logits_t, tgt_t, batch)


# ---------------------------------------------------------------------------
# Reference (pure JAX) and self-test
# ---------------------------------------------------------------------------
def _reference_loss(numerical_outputs, mode_output, targets):
    def ce(logits, t):
        logp = jax.nn.log_softmax(logits.astype(jnp.float32), axis=-1)
        return -jnp.mean(jnp.take_along_axis(logp, t[:, None], axis=-1))
    total = jnp.float32(0.0)
    for i, o in enumerate(numerical_outputs):
        total = total + ce(o, targets[:, i])
    total = total + ce(mode_output, targets[:, 5])
    return total


if __name__ == "__main__":
    def make_inputs(key, batch):
        k_num, k_mode, k_t35, k_t2 = jax.random.split(key, 4)
        num_all = jax.random.normal(k_num, (5, batch, 3), dtype=jnp.float32)
        numerical_outputs = [num_all[i] for i in range(5)]
        mode_output = jax.random.normal(k_mode, (batch, 2), dtype=jnp.float32)
        t_num = jax.random.randint(k_t35, (batch, 5), 0, 3, dtype=jnp.int32)
        t_mode = jax.random.randint(k_t2, (batch, 1), 0, 2, dtype=jnp.int32)
        targets = jnp.concatenate([t_num, t_mode], axis=1)
        return numerical_outputs, mode_output, targets

    key = jax.random.PRNGKey(0)
    k_small, k_large = jax.random.split(key)

    # Small batch (the module's stated shape): no-grid path, 2 DMAs total.
    nouts, mout, tgts = make_inputs(k_small, 8)
    loss = multitask_loss(nouts, mout, tgts)
    jax.block_until_ready(loss)
    ref = _reference_loss(nouts, mout, tgts)
    assert jnp.allclose(loss, ref, rtol=1e-5, atol=1e-5), (loss, ref)

    # Large batch: sublane-packed gridded path with padding + masking (1280 -> 2048).
    nouts_l, mout_l, tgts_l = make_inputs(k_large, 1280)
    loss_l = multitask_loss(nouts_l, mout_l, tgts_l)
    jax.block_until_ready(loss_l)
    ref_l = _reference_loss(nouts_l, mout_l, tgts_l)
    assert jnp.allclose(loss_l, ref_l, rtol=1e-4, atol=1e-4), (loss_l, ref_l)

    print("KERNEL_OK")
</pallas_src>

<mosaic_0001>
module attributes {stable_mosaic.version = 11 : i64} {
  func.func @_flat_kernel(%arg0: memref<17x8xf32, #tpu.memory_space<vmem>>, %arg1: memref<6x8xi32, #tpu.memory_space<vmem>>, %arg2: memref<1x1xf32, #tpu.memory_space<vmem>>) attributes {dimension_semantics = [], scalar_prefetch = 0 : i64, scratch_operands = 0 : i64, tpu.core_type = #tpu.core_type<tc>} {
    %c0 = arith.constant 0 : index
    %c0_0 = arith.constant 0 : index
    %0 = vector.load %arg0[%c0, %c0_0] : memref<17x8xf32, #tpu.memory_space<vmem>>, vector<17x8xf32>
    %c0_1 = arith.constant 0 : index
    %c0_2 = arith.constant 0 : index
    %1 = vector.load %arg1[%c0_1, %c0_2] : memref<6x8xi32, #tpu.memory_space<vmem>>, vector<6x8xi32>
    %2 = vector.extract_strided_slice %0 {offsets = [0, 0], sizes = [1, 8], strides = [1, 1]} : vector<17x8xf32> to vector<1x8xf32>
    %3 = vector.extract_strided_slice %0 {offsets = [1, 0], sizes = [1, 8], strides = [1, 1]} : vector<17x8xf32> to vector<1x8xf32>
    %4 = vector.extract_strided_slice %0 {offsets = [2, 0], sizes = [1, 8], strides = [1, 1]} : vector<17x8xf32> to vector<1x8xf32>
    %5 = vector.extract_strided_slice %1 {offsets = [0, 0], sizes = [1, 8], strides = [1, 1]} : vector<6x8xi32> to vector<1x8xi32>
    %6 = arith.maximumf %2, %3 : vector<1x8xf32>
    %7 = arith.maximumf %6, %4 : vector<1x8xf32>
    %8 = arith.subf %2, %7 : vector<1x8xf32>
    %9 = math.exp %8 : vector<1x8xf32>
    %10 = arith.subf %3, %7 : vector<1x8xf32>
    %11 = math.exp %10 : vector<1x8xf32>
    %12 = arith.addf %9, %11 : vector<1x8xf32>
    %13 = arith.subf %4, %7 : vector<1x8xf32>
    %14 = math.exp %13 : vector<1x8xf32>
    %15 = arith.addf %12, %14 : vector<1x8xf32>
    %16 = math.log %15 : vector<1x8xf32>
    %17 = arith.addf %7, %16 : vector<1x8xf32>
    %c0_i32 = arith.constant 0 : i32
    %18 = vector.broadcast %c0_i32 : i32 to vector<1x8xi32>
    %19 = arith.cmpi eq, %5, %18 : vector<1x8xi32>
    %c1_i32 = arith.constant 1 : i32
    %20 = vector.broadcast %c1_i32 : i32 to vector<1x8xi32>
    %21 = arith.cmpi eq, %5, %20 : vector<1x8xi32>
    %22 = arith.select %21, %3, %4 : vector<1x8xi1>, vector<1x8xf32>
    %23 = arith.select %19, %2, %22 : vector<1x8xi1>, vector<1x8xf32>
    %24 = arith.subf %17, %23 : vector<1x8xf32>
    %25 = vector.extract_strided_slice %0 {offsets = [3, 0], sizes = [1, 8], strides = [1, 1]} : vector<17x8xf32> to vector<1x8xf32>
    %26 = vector.extract_strided_slice %0 {offsets = [4, 0], sizes = [1, 8], strides = [1, 1]} : vector<17x8xf32> to vector<1x8xf32>
    %27 = vector.extract_strided_slice %0 {offsets = [5, 0], sizes = [1, 8], strides = [1, 1]} : vector<17x8xf32> to vector<1x8xf32>
    %28 = vector.extract_strided_slice %1 {offsets = [1, 0], sizes = [1, 8], strides = [1, 1]} : vector<6x8xi32> to vector<1x8xi32>
    %29 = arith.maximumf %25, %26 : vector<1x8xf32>
    %30 = arith.maximumf %29, %27 : vector<1x8xf32>
    %31 = arith.subf %25, %30 : vector<1x8xf32>
    %32 = math.exp %31 : vector<1x8xf32>
    %33 = arith.subf %26, %30 : vector<1x8xf32>
    %34 = math.exp %33 : vector<1x8xf32>
    %35 = arith.addf %32, %34 : vector<1x8xf32>
    %36 = arith.subf %27, %30 : vector<1x8xf32>
    %37 = math.exp %36 : vector<1x8xf32>
    %38 = arith.addf %35, %37 : vector<1x8xf32>
    %39 = math.log %38 : vector<1x8xf32>
    %40 = arith.addf %30, %39 : vector<1x8xf32>
    %c0_i32_3 = arith.constant 0 : i32
    %41 = vector.broadcast %c0_i32_3 : i32 to vector<1x8xi32>
    %42 = arith.cmpi eq, %28, %41 : vector<1x8xi32>
    %c1_i32_4 = arith.constant 1 : i32
    %43 = vector.broadcast %c1_i32_4 : i32 to vector<1x8xi32>
    %44 = arith.cmpi eq, %28, %43 : vector<1x8xi32>
    %45 = arith.select %44, %26, %27 : vector<1x8xi1>, vector<1x8xf32>
    %46 = arith.select %42, %25, %45 : vector<1x8xi1>, vector<1x8xf32>
    %47 = arith.subf %40, %46 : vector<1x8xf32>
    %48 = arith.addf %24, %47 : vector<1x8xf32>
    %49 = vector.extract_strided_slice %0 {offsets = [6, 0], sizes = [1, 8], strides = [1, 1]} : vector<17x8xf32> to vector<1x8xf32>
    %50 = vector.extract_strided_slice %0 {offsets = [7, 0], sizes = [1, 8], strides = [1, 1]} : vector<17x8xf32> to vector<1x8xf32>
    %51 = vector.extract_strided_slice %0 {offsets = [8, 0], sizes = [1, 8], strides = [1, 1]} : vector<17x8xf32> to vector<1x8xf32>
    %52 = vector.extract_strided_slice %1 {offsets = [2, 0], sizes = [1, 8], strides = [1, 1]} : vector<6x8xi32> to vector<1x8xi32>
    %53 = arith.maximumf %49, %50 : vector<1x8xf32>
    %54 = arith.maximumf %53, %51 : vector<1x8xf32>
    %55 = arith.subf %49, %54 : vector<1x8xf32>
    %56 = math.exp %55 : vector<1x8xf32>
    %57 = arith.subf %50, %54 : vector<1x8xf32>
    %58 = math.exp %57 : vector<1x8xf32>
    %59 = arith.addf %56, %58 : vector<1x8xf32>
    %60 = arith.subf %51, %54 : vector<1x8xf32>
    %61 = math.exp %60 : vector<1x8xf32>
    %62 = arith.addf %59, %61 : vector<1x8xf32>
    %63 = math.log %62 : vector<1x8xf32>
    %64 = arith.addf %54, %63 : vector<1x8xf32>
    %c0_i32_5 = arith.constant 0 : i32
    %65 = vector.broadcast %c0_i32_5 : i32 to vector<1x8xi32>
    %66 = arith.cmpi eq, %52, %65 : vector<1x8xi32>
    %c1_i32_6 = arith.constant 1 : i32
    %67 = vector.broadcast %c1_i32_6 : i32 to vector<1x8xi32>
    %68 = arith.cmpi eq, %52, %67 : vector<1x8xi32>
    %69 = arith.select %68, %50, %51 : vector<1x8xi1>, vector<1x8xf32>
    %70 = arith.select %66, %49, %69 : vector<1x8xi1>, vector<1x8xf32>
    %71 = arith.subf %64, %70 : vector<1x8xf32>
    %72 = arith.addf %48, %71 : vector<1x8xf32>
    %73 = vector.extract_strided_slice %0 {offsets = [9, 0], sizes = [1, 8], strides = [1, 1]} : vector<17x8xf32> to vector<1x8xf32>
    %74 = vector.extract_strided_slice %0 {offsets = [10, 0], sizes = [1, 8], strides = [1, 1]} : vector<17x8xf32> to vector<1x8xf32>
    %75 = vector.extract_strided_slice %0 {offsets = [11, 0], sizes = [1, 8], strides = [1, 1]} : vector<17x8xf32> to vector<1x8xf32>
    %76 = vector.extract_strided_slice %1 {offsets = [3, 0], sizes = [1, 8], strides = [1, 1]} : vector<6x8xi32> to vector<1x8xi32>
    %77 = arith.maximumf %73, %74 : vector<1x8xf32>
    %78 = arith.maximumf %77, %75 : vector<1x8xf32>
    %79 = arith.subf %73, %78 : vector<1x8xf32>
    %80 = math.exp %79 : vector<1x8xf32>
    %81 = arith.subf %74, %78 : vector<1x8xf32>
    %82 = math.exp %81 : vector<1x8xf32>
    %83 = arith.addf %80, %82 : vector<1x8xf32>
    %84 = arith.subf %75, %78 : vector<1x8xf32>
    %85 = math.exp %84 : vector<1x8xf32>
    %86 = arith.addf %83, %85 : vector<1x8xf32>
    %87 = math.log %86 : vector<1x8xf32>
    %88 = arith.addf %78, %87 : vector<1x8xf32>
    %c0_i32_7 = arith.constant 0 : i32
    %89 = vector.broadcast %c0_i32_7 : i32 to vector<1x8xi32>
    %90 = arith.cmpi eq, %76, %89 : vector<1x8xi32>
    %c1_i32_8 = arith.constant 1 : i32
    %91 = vector.broadcast %c1_i32_8 : i32 to vector<1x8xi32>
    %92 = arith.cmpi eq, %76, %91 : vector<1x8xi32>
    %93 = arith.select %92, %74, %75 : vector<1x8xi1>, vector<1x8xf32>
    %94 = arith.select %90, %73, %93 : vector<1x8xi1>, vector<1x8xf32>
    %95 = arith.subf %88, %94 : vector<1x8xf32>
    %96 = arith.addf %72, %95 : vector<1x8xf32>
    %97 = vector.extract_strided_slice %0 {offsets = [12, 0], sizes = [1, 8], strides = [1, 1]} : vector<17x8xf32> to vector<1x8xf32>
    %98 = vector.extract_strided_slice %0 {offsets = [13, 0], sizes = [1, 8], strides = [1, 1]} : vector<17x8xf32> to vector<1x8xf32>
    %99 = vector.extract_strided_slice %0 {offsets = [14, 0], sizes = [1, 8], strides = [1, 1]} : vector<17x8xf32> to vector<1x8xf32>
    %100 = vector.extract_strided_slice %1 {offsets = [4, 0], sizes = [1, 8], strides = [1, 1]} : vector<6x8xi32> to vector<1x8xi32>
    %101 = arith.maximumf %97, %98 : vector<1x8xf32>
    %102 = arith.maximumf %101, %99 : vector<1x8xf32>
    %103 = arith.subf %97, %102 : vector<1x8xf32>
    %104 = math.exp %103 : vector<1x8xf32>
    %105 = arith.subf %98, %102 : vector<1x8xf32>
    %106 = math.exp %105 : vector<1x8xf32>
    %107 = arith.addf %104, %106 : vector<1x8xf32>
    %108 = arith.subf %99, %102 : vector<1x8xf32>
    %109 = math.exp %108 : vector<1x8xf32>
    %110 = arith.addf %107, %109 : vector<1x8xf32>
    %111 = math.log %110 : vector<1x8xf32>
    %112 = arith.addf %102, %111 : vector<1x8xf32>
    %c0_i32_9 = arith.constant 0 : i32
    %113 = vector.broadcast %c0_i32_9 : i32 to vector<1x8xi32>
    %114 = arith.cmpi eq, %100, %113 : vector<1x8xi32>
    %c1_i32_10 = arith.constant 1 : i32
    %115 = vector.broadcast %c1_i32_10 : i32 to vector<1x8xi32>
    %116 = arith.cmpi eq, %100, %115 : vector<1x8xi32>
    %117 = arith.select %116, %98, %99 : vector<1x8xi1>, vector<1x8xf32>
    %118 = arith.select %114, %97, %117 : vector<1x8xi1>, vector<1x8xf32>
    %119 = arith.subf %112, %118 : vector<1x8xf32>
    %120 = arith.addf %96, %119 : vector<1x8xf32>
    %121 = vector.extract_strided_slice %0 {offsets = [15, 0], sizes = [1, 8], strides = [1, 1]} : vector<17x8xf32> to vector<1x8xf32>
    %122 = vector.extract_strided_slice %0 {offsets = [16, 0], sizes = [1, 8], strides = [1, 1]} : vector<17x8xf32> to vector<1x8xf32>
    %123 = vector.extract_strided_slice %1 {offsets = [5, 0], sizes = [1, 8], strides = [1, 1]} : vector<6x8xi32> to vector<1x8xi32>
    %c0_i32_11 = arith.constant 0 : i32
    %124 = vector.broadcast %c0_i32_11 : i32 to vector<1x8xi32>
    %125 = arith.cmpi eq, %123, %124 : vector<1x8xi32>
    %126 = arith.subf %122, %121 : vector<1x8xf32>
    %127 = arith.subf %121, %122 : vector<1x8xf32>
    %128 = arith.select %125, %126, %127 : vector<1x8xi1>, vector<1x8xf32>
    %cst = arith.constant 0.000000e+00 : f32
    %129 = vector.broadcast %cst : f32 to vector<1x8xf32>
    %130 = arith.maximumf %128, %129 : vector<1x8xf32>
    %131 = math.absf %128 : vector<1x8xf32>
    %cst_12 = arith.constant 0.000000e+00 : f32
    %132 = vector.broadcast %cst_12 : f32 to vector<1x8xf32>
    %133 = arith.subf %132, %131 : vector<1x8xf32>
    %134 = math.exp %133 : vector<1x8xf32>
    %cst_13 = arith.constant 1.000000e+00 : f32
    %135 = vector.broadcast %cst_13 : f32 to vector<1x8xf32>
    %136 = arith.addf %135, %134 : vector<1x8xf32>
    %137 = math.log %136 : vector<1x8xf32>
    %138 = arith.addf %130, %137 : vector<1x8xf32>
    %139 = arith.addf %120, %138 : vector<1x8xf32>
    %cst_14 = arith.constant dense<0.000000e+00> : vector<1xf32>
    %140 = vector.multi_reduction <add>, %139, %cst_14 [1] : vector<1x8xf32> to vector<1xf32>
    %141 = vector.shape_cast %140 : vector<1xf32> to vector<1x1xf32>
    %cst_15 = arith.constant 1.250000e-01 : f32
    %142 = vector.broadcast %cst_15 : f32 to vector<1x1xf32>
    %143 = arith.mulf %141, %142 : vector<1x1xf32>
    %c0_16 = arith.constant 0 : index
    %c0_17 = arith.constant 0 : index
    %144 = vector.load %arg2[%c0_16, %c0_17] : memref<1x1xf32, #tpu.memory_space<vmem>>, vector<1x1xf32>
    tpu.vector_store %arg2[%c0_16, %c0_17], %143 {strides = array<i32>} : memref<1x1xf32, #tpu.memory_space<vmem>>, vector<1x1xf32>,
    return
  }
}

</mosaic_0001>

<llo_original>
// kernel: tpu_custom_call.1
$region0: #{tpu_custom_call.1}
  #allocation0 [shape = 'u32[]', space=smem, size = 0x4, offset = 0x4, fixed_abs, tag = 'smem constant byte address 0x4 - core index']
  #allocation1 [shape = 'u32[144,128]{1,0:T(1,128)}', space=vmem, size = 0x12000, scoped, tag = 'internal scratch']
  %s0 = inlined_call_operand.vmem [shape: f32[17,8], index: 0, kind: input, shape index: {}]
  %s1 = inlined_call_operand.vmem [shape: s32[6,8], index: 1, kind: input, shape index: {}]
  %s2 = inlined_call_operand.hbm [shape: f32[1,1], index: 2, kind: output, shape index: {}]
  %s3 = sld [smem:[#allocation0]]
  $region18: #{tpu_custom_call.1} parent=0
    _
  %s5 = ssub.s32 1, %s3
  %s6 = scalar_select 0, %s5, %s3
  $region1: #{tpu_custom_call.1} parent=0
    #allocation2 [shape = 'u8[512]{0}', space=vmem, size = 0x400, scoped, tag = 'output window, operand 0, single buffered']
    #allocation3 [shape = 's32[1]{0}', space=sflag, size = 0x4, scoped, tag = 'scoped memory for tpu_custom_call.1']
    %7 = vsyncpa [#allocation3], 0
    // Predicated region
    $region2: #{tpu_custom_call.1} parent=1 // pred_check
      _
    $region3: #{tpu_custom_call.1} parent=1 // pred_check_branch
      %9 = sbr.rel (0) target = $region5
    $region4: #{tpu_custom_call.1} parent=1 // pred_region
      _
    $region5: #{tpu_custom_call.1} parent=1 // pred_fallthru
      _
    // Predicated region
    $region6: #{tpu_custom_call.1} parent=1 // pred_check
      _
    $region7: #{tpu_custom_call.1} parent=1 // pred_check_branch
      %11 = sbr.rel (0) target = $region9
    $region8: #{tpu_custom_call.1} parent=1 // pred_region
      _
    $region9: #{tpu_custom_call.1} parent=1 // pred_fallthru
      _
    %v12 = vld [vmem:[%s0] sm:$0xff]
    %v13 = vld [vmem:[%s0 + $0x8] sm:$0xff]
    %v14 = vld [vmem:[%s0 + $0x10] sm:$0x1]
    %v15 = vld [vmem:[%s1] sm:$0x3f]
    %v17 = vrot.slane %v12, 1
    %v19 = vmax.f32 %v12, %v17
    %v20 = vrot.slane %v12, 2
    %v22 = vmax.f32 %v19, %v20
    %v23 = vsub.f32 %v12, %v22
    %v24 = vmul.f32 %v23, 1.442695
    %v25 = vpow.pop %v24
    %v27 = vrot.slane %v22, 7
    %v29 = vsub.f32 %v12, %v27
    %v30 = vmul.f32 %v29, 1.442695
    %v31 = vpow.pop %v30
    %v33 = vrot.slane %v31, 1
    %v35 = vadd.f32 %v25, %v33
    %v36 = vrot.slane %v22, 6
    %v38 = vsub.f32 %v12, %v36
    %v39 = vmul.f32 %v38, 1.442695
    %v40 = vpow.pop %v39
    %v42 = vrot.slane %v40, 2
    %v44 = vadd.f32 %v35, %v42
    %v45 = vlog2.pop %v44
    %v46 = vmul.f32 %v45, 0.6931472
    %v47 = vadd.f32 %v22, %v46
    %vm48 = vcmp.eq.s32.totalorder %v15, 0
    %vm49 = vcmp.eq.s32.totalorder %v15, 1
    %v50 = vsel %vm49, %v17, %v20
    %v51 = vsel %vm48, %v12, %v50
    %v52 = vsub.f32 %v47, %v51
    %v53 = vrot.slane %v12, 3
    %v55 = vrot.slane %v12, 4
    %v57 = vsel %vm49, %v53, %v55
    %v58 = vsel %vm48, %v20, %v57
    %v60 = vrot.slane %v58, 6
    %v62 = vsub.f32 %v47, %v60
    %v64 = vrot.slane %v62, 3
    %v66 = vadd.f32 %v52, %v64
    %v68 = vrot.slane %v13, 2
    %v70 = vmax.f32 %v19, %v68
    %v71 = vsub.f32 %v12, %v70
    %v72 = vmul.f32 %v71, 1.442695
    %v73 = vpow.pop %v72
    %v75 = vrot.slane %v70, 7
    %v77 = vsub.f32 %v12, %v75
    %v78 = vmul.f32 %v77, 1.442695
    %v79 = vpow.pop %v78
    %v81 = vrot.slane %v79, 1
    %v83 = vadd.f32 %v73, %v81
    %v84 = vrot.slane %v70, 6
    %v86 = vsub.f32 %v13, %v84
    %v87 = vmul.f32 %v86, 1.442695
    %v88 = vpow.pop %v87
    %v90 = vrot.slane %v88, 2
    %v92 = vadd.f32 %v83, %v90
    %v93 = vlog2.pop %v92
    %v94 = vmul.f32 %v93, 0.6931472
    %v95 = vadd.f32 %v70, %v94
    %v96 = vrot.slane %v12, 5
    %v98 = vrot.slane %v13, 6
    %v100 = vsel %vm49, %v96, %v98
    %v101 = vsel %vm48, %v55, %v100
    %v103 = vrot.slane %v101, 4
    %v105 = vsub.f32 %v95, %v103
    %v107 = vrot.slane %v105, 6
    %v109 = vadd.f32 %v66, %v107
    %v110 = vrot.slane %v13, 1
    %v112 = vmax.f32 %v13, %v110
    %v113 = vmax.f32 %v112, %v68
    %v114 = vsub.f32 %v13, %v113
    %v115 = vmul.f32 %v114, 1.442695
    %v116 = vpow.pop %v115
    %v118 = vrot.slane %v113, 7
    %v120 = vsub.f32 %v13, %v118
    %v121 = vmul.f32 %v120, 1.442695
    %v122 = vpow.pop %v121
    %v124 = vrot.slane %v122, 1
    %v126 = vadd.f32 %v116, %v124
    %v127 = vrot.slane %v113, 6
    %v129 = vsub.f32 %v13, %v127
    %v130 = vmul.f32 %v129, 1.442695
    %v131 = vpow.pop %v130
    %v133 = vrot.slane %v131, 2
    %v135 = vadd.f32 %v126, %v133
    %v136 = vlog2.pop %v135
    %v137 = vmul.f32 %v136, 0.6931472
    %v138 = vadd.f32 %v113, %v137
    %v139 = vrot.slane %v13, 7
    %v141 = vsel %vm49, %v139, %v13
    %v142 = vsel %vm48, %v98, %v141
    %v144 = vrot.slane %v142, 2
    %v146 = vsub.f32 %v138, %v144
    %v148 = vrot.slane %v146, 1
    %v150 = vadd.f32 %v109, %v148
    %v151 = vsel %vm49, %v110, %v68
    %v152 = vsel %vm48, %v13, %v151
    %v153 = vsub.f32 %v138, %v152
    %v155 = vrot.slane %v153, 4
    %v157 = vadd.f32 %v150, %v155
    %v158 = vsub.f32 %v14, %v139
    %v160 = vrot.slane %v14, 1
    %v162 = vsub.f32 %v13, %v160
    %v164 = vrot.slane %v158, 3
    %v167 = vrot.slane %v162, 2
    %v169 = vsel %vm48, %v164, %v167
    %v170 = vmax.f32 %v169, 0.0
    %v171 = vand.u32 2147483647, %v169
    %v172 = vsub.f32 0.0, %v171
    %v173 = vmul.f32 %v172, 1.442695
    %v174 = vpow.pop %v173
    %v175 = vadd.f32 %v174, 1.0
    %v176 = vlog2.pop %v175
    %v177 = vmul.f32 %v176, 0.6931472
    %v178 = vadd.f32 %v170, %v177
    %v180 = vrot.slane %v178, 5
    %v182 = vadd.f32 %v157, %v180
    %vm183 = vcmask 57344
    %v184 = vsel %vm183, %v182, 0.0
    %185 = vadd.xlane.f32.xlu0 %v184
    %v186 = vpop.xlane.xlu0 %185
    %v187 = vmul.f32 %v186, 0.125
    %vm188 = vcmask 0
    %189 = vst.msk [vmem:[#allocation2] sm:$0x1] %vm188, %v187
    // Predicated region
    $region10: #{tpu_custom_call.1} parent=1 // pred_check
      _
    $region11: #{tpu_custom_call.1} parent=1 // pred_check_branch
      %191 = sbr.rel (0) target = $region13
    $region12: #{tpu_custom_call.1} parent=1 // pred_region
      %s193 = ssub.s32 16, 16
      %194 = vsyncadd [#allocation3], %s193
      %s196 = sshll.u32 [#allocation2], 4
      %s197 = int_to_ptr.vmem [resolvable:$true] %s196
      %199 = dma.vmem_to_hbm [thread:$0]  %s197, 16, %s2, [#allocation3]
    $region13: #{tpu_custom_call.1} parent=1 // pred_fallthru
      _
    // Predicated region
    $region14: #{tpu_custom_call.1} parent=1 // pred_check
      _
    $region15: #{tpu_custom_call.1} parent=1 // pred_check_branch
      %201 = sbr.rel (0) target = $region17
    $region16: #{tpu_custom_call.1} parent=1 // pred_region
      %202 = dma.done [#allocation3], 16
    $region17: #{tpu_custom_call.1} parent=1 // pred_fallthru
      _
    %203 = vsyncpa [#allocation3], 1

</llo_original>
